<compile_context>
chip_gen: v6e
topology: v6e:2x2x1
jax: 0.10.0
libtpu: 0.0.40
codegen_flags: <defaults>
</compile_context>

<pallas_src>
import functools

import numpy as np

import jax
import jax.numpy as jnp
from jax import lax
from jax.experimental import pallas as pl
from jax.experimental.pallas import tpu as pltpu


def _down_kernel(x_ref, sel_ref, mask_ref, w_ref, o_ref, patches_ref, *,
                 N, H, W, KH, KW, KPAD):
    # x_ref:       (Cin, N*H*W)     input, batch folded into lanes
    # sel_ref:     (N*H*W, N*P)     0/1 pool-corner gather matrix (precomputed)
    # mask_ref:    (KH*KW, N*P)     0/1 per-tap border masks (precomputed)
    # w_ref:       (Cout, KPAD)     weights (tap-major/cin-minor) + bias column
    # o_ref:       (Cout, N*P)      lane-dense output
    # patches_ref: (KPAD, N*P)      f32 VMEM scratch (8-row aligned im2col)
    Cin = x_ref.shape[0]
    HW = H * W
    Hh, Wh = H // 2, W // 2
    P = Hh * Wh
    NHW = N * HW
    NP = N * P
    KC = KH * KW * Cin

    x2 = x_ref[...]                                            # (Cin, N*HW)

    # ---- MaxPool2d(2): two XLU lane-rotates + VPU max --------------------
    # Only lanes r = n*HW + 2a*W + 2b are consumed by `sel`, and for those the
    # circular wrap never crosses a row or image boundary.
    m1 = jnp.maximum(x2, pltpu.roll(x2, NHW - 1, axis=1))      # max(x[r], x[r+1])
    m2 = jnp.maximum(m1, pltpu.roll(m1, NHW - W, axis=1))      # full 2x2 max

    # ---- compact the strided pooled grid to lane-dense (Cin, N*P) --------
    # One MXU matmul against the precomputed 0/1 selection matrix (exact).
    pooled = jnp.dot(m2, sel_ref[...], preferred_element_type=jnp.float32)

    # ---- im2col: 8 whole-vreg rotates + precomputed border masks ---------
    # Each tap's Cin rows are written straight into the aligned scratch.
    for kh in range(KH):
        for kw in range(KW):
            t = kh * KW + kw
            dh = kh - KH // 2
            dw = kw - KW // 2
            s = dh * Wh + dw
            if s == 0:
                tap = pooled                                   # center tap
            else:
                shifted = pltpu.roll(pooled, (-s) % NP, axis=1)
                tap = shifted * mask_ref[pl.ds(t, 1), :]       # zero-pad / no leak
            patches_ref[pl.ds(t * Cin, Cin), :] = tap.astype(jnp.float32)

    # Bias row (ones) + zero the remaining pad rows of the scratch.
    patches_ref[pl.ds(KC, 1), :] = jnp.ones((1, NP), jnp.float32)
    if KPAD - KC - 1 > 0:
        patches_ref[pl.ds(KC + 1, KPAD - KC - 1), :] = jnp.zeros(
            (KPAD - KC - 1, NP), jnp.float32)

    # ---- single fused conv contraction (+ bias via ones row) + ReLU ------
    acc = jnp.dot(w_ref[...], patches_ref[...],
                  preferred_element_type=jnp.float32)          # (Cout, N*P)
    o_ref[...] = jnp.maximum(acc, 0.0).astype(o_ref.dtype)


def down_forward(x_nchw, w_oihw, bias):
    """Down: MaxPool2d(2) -> Conv2d(k, padding=k//2, bias) -> ReLU (NCHW in/out)."""
    N, Cin, H, W = x_nchw.shape
    Cout, Cin_w, KH, KW = w_oihw.shape
    assert Cin == Cin_w and H % 2 == 0 and W % 2 == 0
    Hh, Wh = H // 2, W // 2
    HW, P = H * W, Hh * Wh
    NHW, NP = N * HW, N * P
    KC = KH * KW * Cin
    KPAD = 8 * int(pl.cdiv(KC + 1, 8))   # taps*Cin + 1 bias row, 8-row aligned

    # Activations: fold the batch into the lane axis -> (Cin, N*H*W).
    xf = jnp.transpose(x_nchw, (1, 0, 2, 3)).reshape(Cin, NHW)

    # Weights: tap-major / cin-minor columns, bias folded in as column KC.
    w2 = jnp.transpose(w_oihw, (0, 2, 3, 1)).reshape(Cout, KC)
    wp = jnp.zeros((Cout, KPAD), dtype=w2.dtype)
    wp = wp.at[:, :KC].set(w2).at[:, KC].set(bias)

    # Host-precomputed constants (hoisted out of the kernel; under jit these
    # are folded once and simply DMA'd by the pipeline).
    l = np.arange(NP)
    n_i, q = l // P, l % P
    a_i, b_i = q // Wh, q % Wh
    src = n_i * HW + 2 * a_i * W + 2 * b_i                     # pool top-left lane
    sel = jnp.asarray(
        (np.arange(NHW)[:, None] == src[None, :]).astype(np.float32))
    masks_np = np.zeros((KH * KW, NP), np.float32)
    for kh in range(KH):
        for kw in range(KW):
            dh, dw = kh - KH // 2, kw - KW // 2
            masks_np[kh * KW + kw] = ((a_i + dh >= 0) & (a_i + dh < Hh) &
                                      (b_i + dw >= 0) & (b_i + dw < Wh))
    masks = jnp.asarray(masks_np)

    kernel = functools.partial(_down_kernel, N=N, H=H, W=W, KH=KH, KW=KW,
                               KPAD=KPAD)

    out_flat = pl.pallas_call(
        kernel,
        out_shape=jax.ShapeDtypeStruct((Cout, NP), x_nchw.dtype),
        grid_spec=pltpu.PrefetchScalarGridSpec(
            num_scalar_prefetch=0,
            grid=(1,),                                   # single step, no per-image overhead
            in_specs=[
                pl.BlockSpec((Cin, NHW), lambda i: (0, 0)),
                pl.BlockSpec((NHW, NP), lambda i: (0, 0)),
                pl.BlockSpec((KH * KW, NP), lambda i: (0, 0)),
                pl.BlockSpec((Cout, KPAD), lambda i: (0, 0)),
            ],
            out_specs=pl.BlockSpec((Cout, NP), lambda i: (0, 0)),
            scratch_shapes=[pltpu.VMEM((KPAD, NP), jnp.float32)],
        ),
        compiler_params=pltpu.CompilerParams(
            dimension_semantics=("arbitrary",)),
    )(xf, sel, masks, wp)

    # (Cout, N*P) -> (N, Cout, Hh, Wh): tiny layout fixup outside the kernel.
    return out_flat.reshape(Cout, N, Hh, Wh).transpose(1, 0, 2, 3)


if __name__ == "__main__":
    key = jax.random.PRNGKey(0)
    k_x, k_w, k_b = jax.random.split(key, 3)

    N, Cin, Cout, H, W, K = 2, 4, 8, 16, 16, 3

    x = jax.random.normal(k_x, (N, Cin, H, W), dtype=jnp.float32)
    # Deterministic synthetic parameters (shapes match nn.Conv2d(Cin, Cout, 3)).
    fan_in = Cin * K * K
    w = jax.random.normal(k_w, (Cout, Cin, K, K), dtype=jnp.float32) / jnp.sqrt(fan_in)
    b = jax.random.normal(k_b, (Cout,), dtype=jnp.float32) * 0.1

    out = jax.block_until_ready(down_forward(x, w, b))

    # Reference: MaxPool2d(2) -> Conv2d(3, padding=1, bias) -> ReLU via XLA.
    pooled = lax.reduce_window(x, -jnp.inf, lax.max,
                               (1, 1, 2, 2), (1, 1, 2, 2), "VALID")
    ref = lax.conv_general_dilated(
        pooled, w, window_strides=(1, 1), padding="SAME",
        dimension_numbers=("NCHW", "OIHW", "NCHW"))
    ref = jnp.maximum(ref + b[None, :, None, None], 0.0)

    assert out.shape == (N, Cout, H // 2, W // 2)
    err = float(jnp.max(jnp.abs(out - ref)))
    assert jnp.allclose(out, ref, atol=1e-4, rtol=1e-4), err

    print("KERNEL_OK")
</pallas_src>

<mosaic_0001>
module attributes {stable_mosaic.version = 11 : i64} {
  func.func @_down_kernel(%arg0: i32, %arg1: memref<4x512xf32, #tpu.memory_space<vmem>>, %arg2: memref<512x128xf32, #tpu.memory_space<vmem>>, %arg3: memref<9x128xf32, #tpu.memory_space<vmem>>, %arg4: memref<8x40xf32, #tpu.memory_space<vmem>>, %arg5: memref<8x128xf32, #tpu.memory_space<vmem>>, %arg6: memref<40x128xf32, #tpu.memory_space<vmem>>) attributes {dimension_semantics = [#tpu.dimension_semantics<arbitrary>], iteration_bounds = array<i64: 1>, scalar_prefetch = 0 : i64, scratch_operands = 1 : i64, tpu.core_type = #tpu.core_type<tc>, window_params = [{pipeline_mode = #tpu.pipeline_mode<synchronous>, transform_indices = @transform_0, window_bounds = array<i64: 4, 512>}, {pipeline_mode = #tpu.pipeline_mode<synchronous>, transform_indices = @transform_1, window_bounds = array<i64: 512, 128>}, {pipeline_mode = #tpu.pipeline_mode<synchronous>, transform_indices = @transform_2, window_bounds = array<i64: 9, 128>}, {pipeline_mode = #tpu.pipeline_mode<synchronous>, transform_indices = @transform_3, window_bounds = array<i64: 8, 40>}, {pipeline_mode = #tpu.pipeline_mode<synchronous>, transform_indices = @transform_4, window_bounds = array<i64: 8, 128>}]} {
    %c0 = arith.constant 0 : index
    %c0_0 = arith.constant 0 : index
    %0 = vector.load %arg1[%c0, %c0_0] : memref<4x512xf32, #tpu.memory_space<vmem>>, vector<4x512xf32>
    %c511_i32 = arith.constant 511 : i32
    %1 = tpu.dynamic_rotate %0 by %c511_i32 dim 1 : vector<4x512xf32>, i32 -> vector<4x512xf32>
    %2 = arith.maximumf %0, %1 : vector<4x512xf32>
    %c496_i32 = arith.constant 496 : i32
    %3 = tpu.dynamic_rotate %2 by %c496_i32 dim 1 : vector<4x512xf32>, i32 -> vector<4x512xf32>
    %4 = arith.maximumf %2, %3 : vector<4x512xf32>
    %c0_1 = arith.constant 0 : index
    %c0_2 = arith.constant 0 : index
    %5 = vector.load %arg2[%c0_1, %c0_2] : memref<512x128xf32, #tpu.memory_space<vmem>>, vector<512x128xf32>
    %cst = arith.constant dense<0.000000e+00> : vector<4x128xf32>
    %6 = tpu.matmul %4, %5, %cst {dimension_numbers = #tpu.dot_dimension_numbers<[1], [0], [0], [1], [0, 0, 1, 1], [], []>} : vector<4x512xf32>, vector<512x128xf32>, vector<4x128xf32> -> vector<4x128xf32>
    %c9_i32 = arith.constant 9 : i32
    %7 = tpu.dynamic_rotate %6 by %c9_i32 dim 1 : vector<4x128xf32>, i32 -> vector<4x128xf32>
    %c0_3 = arith.constant 0 : index
    %c0_4 = arith.constant 0 : index
    %8 = vector.load %arg3[%c0_3, %c0_4] : memref<9x128xf32, #tpu.memory_space<vmem>>, vector<1x128xf32>
    %9 = vector.broadcast %8 : vector<1x128xf32> to vector<4x128xf32>
    %10 = arith.mulf %7, %9 : vector<4x128xf32>
    %c0_5 = arith.constant 0 : index
    %c0_6 = arith.constant 0 : index
    %11 = vector.load %arg6[%c0_5, %c0_6] : memref<40x128xf32, #tpu.memory_space<vmem>>, vector<4x128xf32>
    tpu.vector_store %arg6[%c0_5, %c0_6], %10 {strides = array<i32>} : memref<40x128xf32, #tpu.memory_space<vmem>>, vector<4x128xf32>,
    %c8_i32 = arith.constant 8 : i32
    %12 = tpu.dynamic_rotate %6 by %c8_i32 dim 1 : vector<4x128xf32>, i32 -> vector<4x128xf32>
    %c1 = arith.constant 1 : index
    %c0_7 = arith.constant 0 : index
    %13 = vector.load %arg3[%c1, %c0_7] : memref<9x128xf32, #tpu.memory_space<vmem>>, vector<1x128xf32>
    %14 = vector.broadcast %13 : vector<1x128xf32> to vector<4x128xf32>
    %15 = arith.mulf %12, %14 : vector<4x128xf32>
    %c4 = arith.constant 4 : index
    %c0_8 = arith.constant 0 : index
    %16 = vector.load %arg6[%c4, %c0_8] : memref<40x128xf32, #tpu.memory_space<vmem>>, vector<4x128xf32>
    tpu.vector_store %arg6[%c4, %c0_8], %15 {strides = array<i32>} : memref<40x128xf32, #tpu.memory_space<vmem>>, vector<4x128xf32>,
    %c7_i32 = arith.constant 7 : i32
    %17 = tpu.dynamic_rotate %6 by %c7_i32 dim 1 : vector<4x128xf32>, i32 -> vector<4x128xf32>
    %c2 = arith.constant 2 : index
    %c0_9 = arith.constant 0 : index
    %18 = vector.load %arg3[%c2, %c0_9] : memref<9x128xf32, #tpu.memory_space<vmem>>, vector<1x128xf32>
    %19 = vector.broadcast %18 : vector<1x128xf32> to vector<4x128xf32>
    %20 = arith.mulf %17, %19 : vector<4x128xf32>
    %c8 = arith.constant 8 : index
    %c0_10 = arith.constant 0 : index
    %21 = vector.load %arg6[%c8, %c0_10] : memref<40x128xf32, #tpu.memory_space<vmem>>, vector<4x128xf32>
    tpu.vector_store %arg6[%c8, %c0_10], %20 {strides = array<i32>} : memref<40x128xf32, #tpu.memory_space<vmem>>, vector<4x128xf32>,
    %c1_i32 = arith.constant 1 : i32
    %22 = tpu.dynamic_rotate %6 by %c1_i32 dim 1 : vector<4x128xf32>, i32 -> vector<4x128xf32>
    %c3 = arith.constant 3 : index
    %c0_11 = arith.constant 0 : index
    %23 = vector.load %arg3[%c3, %c0_11] : memref<9x128xf32, #tpu.memory_space<vmem>>, vector<1x128xf32>
    %24 = vector.broadcast %23 : vector<1x128xf32> to vector<4x128xf32>
    %25 = arith.mulf %22, %24 : vector<4x128xf32>
    %c12 = arith.constant 12 : index
    %c0_12 = arith.constant 0 : index
    %26 = vector.load %arg6[%c12, %c0_12] : memref<40x128xf32, #tpu.memory_space<vmem>>, vector<4x128xf32>
    tpu.vector_store %arg6[%c12, %c0_12], %25 {strides = array<i32>} : memref<40x128xf32, #tpu.memory_space<vmem>>, vector<4x128xf32>,
    %c16 = arith.constant 16 : index
    %c0_13 = arith.constant 0 : index
    %27 = vector.load %arg6[%c16, %c0_13] : memref<40x128xf32, #tpu.memory_space<vmem>>, vector<4x128xf32>
    tpu.vector_store %arg6[%c16, %c0_13], %6 {strides = array<i32>} : memref<40x128xf32, #tpu.memory_space<vmem>>, vector<4x128xf32>,
    %c127_i32 = arith.constant 127 : i32
    %28 = tpu.dynamic_rotate %6 by %c127_i32 dim 1 : vector<4x128xf32>, i32 -> vector<4x128xf32>
    %c5 = arith.constant 5 : index
    %c0_14 = arith.constant 0 : index
    %29 = vector.load %arg3[%c5, %c0_14] : memref<9x128xf32, #tpu.memory_space<vmem>>, vector<1x128xf32>
    %30 = vector.broadcast %29 : vector<1x128xf32> to vector<4x128xf32>
    %31 = arith.mulf %28, %30 : vector<4x128xf32>
    %c20 = arith.constant 20 : index
    %c0_15 = arith.constant 0 : index
    %32 = vector.load %arg6[%c20, %c0_15] : memref<40x128xf32, #tpu.memory_space<vmem>>, vector<4x128xf32>
    tpu.vector_store %arg6[%c20, %c0_15], %31 {strides = array<i32>} : memref<40x128xf32, #tpu.memory_space<vmem>>, vector<4x128xf32>,
    %c121_i32 = arith.constant 121 : i32
    %33 = tpu.dynamic_rotate %6 by %c121_i32 dim 1 : vector<4x128xf32>, i32 -> vector<4x128xf32>
    %c6 = arith.constant 6 : index
    %c0_16 = arith.constant 0 : index
    %34 = vector.load %arg3[%c6, %c0_16] : memref<9x128xf32, #tpu.memory_space<vmem>>, vector<1x128xf32>
    %35 = vector.broadcast %34 : vector<1x128xf32> to vector<4x128xf32>
    %36 = arith.mulf %33, %35 : vector<4x128xf32>
    %c24 = arith.constant 24 : index
    %c0_17 = arith.constant 0 : index
    %37 = vector.load %arg6[%c24, %c0_17] : memref<40x128xf32, #tpu.memory_space<vmem>>, vector<4x128xf32>
    tpu.vector_store %arg6[%c24, %c0_17], %36 {strides = array<i32>} : memref<40x128xf32, #tpu.memory_space<vmem>>, vector<4x128xf32>,
    %c120_i32 = arith.constant 120 : i32
    %38 = tpu.dynamic_rotate %6 by %c120_i32 dim 1 : vector<4x128xf32>, i32 -> vector<4x128xf32>
    %c7 = arith.constant 7 : index
    %c0_18 = arith.constant 0 : index
    %39 = vector.load %arg3[%c7, %c0_18] : memref<9x128xf32, #tpu.memory_space<vmem>>, vector<1x128xf32>
    %40 = vector.broadcast %39 : vector<1x128xf32> to vector<4x128xf32>
    %41 = arith.mulf %38, %40 : vector<4x128xf32>
    %c28 = arith.constant 28 : index
    %c0_19 = arith.constant 0 : index
    %42 = vector.load %arg6[%c28, %c0_19] : memref<40x128xf32, #tpu.memory_space<vmem>>, vector<4x128xf32>
    tpu.vector_store %arg6[%c28, %c0_19], %41 {strides = array<i32>} : memref<40x128xf32, #tpu.memory_space<vmem>>, vector<4x128xf32>,
    %c119_i32 = arith.constant 119 : i32
    %43 = tpu.dynamic_rotate %6 by %c119_i32 dim 1 : vector<4x128xf32>, i32 -> vector<4x128xf32>
    %c8_20 = arith.constant 8 : index
    %c0_21 = arith.constant 0 : index
    %44 = vector.load %arg3[%c8_20, %c0_21] : memref<9x128xf32, #tpu.memory_space<vmem>>, vector<1x128xf32>
    %45 = vector.broadcast %44 : vector<1x128xf32> to vector<4x128xf32>
    %46 = arith.mulf %43, %45 : vector<4x128xf32>
    %c32 = arith.constant 32 : index
    %c0_22 = arith.constant 0 : index
    %47 = vector.load %arg6[%c32, %c0_22] : memref<40x128xf32, #tpu.memory_space<vmem>>, vector<4x128xf32>
    tpu.vector_store %arg6[%c32, %c0_22], %46 {strides = array<i32>} : memref<40x128xf32, #tpu.memory_space<vmem>>, vector<4x128xf32>,
    %cst_23 = arith.constant 1.000000e+00 : f32
    %48 = vector.broadcast %cst_23 : f32 to vector<1x128xf32>
    %c36 = arith.constant 36 : index
    %c0_24 = arith.constant 0 : index
    %49 = vector.load %arg6[%c36, %c0_24] : memref<40x128xf32, #tpu.memory_space<vmem>>, vector<1x128xf32>
    tpu.vector_store %arg6[%c36, %c0_24], %48 {strides = array<i32>} : memref<40x128xf32, #tpu.memory_space<vmem>>, vector<1x128xf32>,
    %cst_25 = arith.constant 0.000000e+00 : f32
    %50 = vector.broadcast %cst_25 : f32 to vector<3x128xf32>
    %c37 = arith.constant 37 : index
    %c0_26 = arith.constant 0 : index
    %51 = vector.load %arg6[%c37, %c0_26] : memref<40x128xf32, #tpu.memory_space<vmem>>, vector<3x128xf32>
    tpu.vector_store %arg6[%c37, %c0_26], %50 {strides = array<i32>} : memref<40x128xf32, #tpu.memory_space<vmem>>, vector<3x128xf32>,
    %c0_27 = arith.constant 0 : index
    %c0_28 = arith.constant 0 : index
    %52 = vector.load %arg4[%c0_27, %c0_28] : memref<8x40xf32, #tpu.memory_space<vmem>>, vector<8x40xf32>
    %c0_29 = arith.constant 0 : index
    %c0_30 = arith.constant 0 : index
    %53 = vector.load %arg6[%c0_29, %c0_30] : memref<40x128xf32, #tpu.memory_space<vmem>>, vector<40x128xf32>
    %cst_31 = arith.constant dense<0.000000e+00> : vector<8x128xf32>
    %54 = tpu.matmul %52, %53, %cst_31 {dimension_numbers = #tpu.dot_dimension_numbers<[1], [0], [0], [1], [0, 0, 1, 1], [], []>} : vector<8x40xf32>, vector<40x128xf32>, vector<8x128xf32> -> vector<8x128xf32>
    %cst_32 = arith.constant 0.000000e+00 : f32
    %55 = vector.broadcast %cst_32 : f32 to vector<8x128xf32>
    %56 = arith.maximumf %54, %55 : vector<8x128xf32>
    %c0_33 = arith.constant 0 : index
    %c0_34 = arith.constant 0 : index
    %57 = vector.load %arg5[%c0_33, %c0_34] : memref<8x128xf32, #tpu.memory_space<vmem>>, vector<8x128xf32>
    tpu.vector_store %arg5[%c0_33, %c0_34], %56 {strides = array<i32>} : memref<8x128xf32, #tpu.memory_space<vmem>>, vector<8x128xf32>,
    return
  }
  func.func @transform_0(%arg0: i32) -> (i32, i32) {
    %c0_i32 = arith.constant 0 : i32
    %c0_i32_0 = arith.constant 0 : i32
    %c0_i32_1 = arith.constant 0 : i32
    return %c0_i32, %c0_i32_0 : i32, i32
  }
  func.func @transform_1(%arg0: i32) -> (i32, i32) {
    %c0_i32 = arith.constant 0 : i32
    %c0_i32_0 = arith.constant 0 : i32
    %c0_i32_1 = arith.constant 0 : i32
    return %c0_i32, %c0_i32_0 : i32, i32
  }
  func.func @transform_2(%arg0: i32) -> (i32, i32) {
    %c0_i32 = arith.constant 0 : i32
    %c0_i32_0 = arith.constant 0 : i32
    %c0_i32_1 = arith.constant 0 : i32
    return %c0_i32, %c0_i32_0 : i32, i32
  }
  func.func @transform_3(%arg0: i32) -> (i32, i32) {
    %c0_i32 = arith.constant 0 : i32
    %c0_i32_0 = arith.constant 0 : i32
    %c0_i32_1 = arith.constant 0 : i32
    return %c0_i32, %c0_i32_0 : i32, i32
  }
  func.func @transform_4(%arg0: i32) -> (i32, i32) {
    %c0_i32 = arith.constant 0 : i32
    %c0_i32_0 = arith.constant 0 : i32
    %c0_i32_1 = arith.constant 0 : i32
    return %c0_i32, %c0_i32_0 : i32, i32
  }
}

</mosaic_0001>

<llo_original>
// kernel: tpu_custom_call.1
$region0: #{tpu_custom_call.1}
  #allocation0 [shape = 'u32[]', space=smem, size = 0x4, offset = 0x4, fixed_abs, tag = 'smem constant byte address 0x4 - core index']
  #allocation1 [shape = 'u32[144,128]{1,0:T(1,128)}', space=vmem, size = 0x12000, scoped, tag = 'internal scratch']
  #allocation2 [shape = 'f32[40,128]{1,0:T(8,128)}', space=vmem, size = 0x5000, scoped, tag = 'scratch operand']
  %s0 = inlined_call_operand.hbm [shape: f32[4,512], index: 0, kind: input, shape index: {}]
  %s1 = inlined_call_operand.hbm [shape: f32[512,128], index: 1, kind: input, shape index: {}]
  %s2 = inlined_call_operand.hbm [shape: f32[9,128], index: 2, kind: input, shape index: {}]
  %s3 = inlined_call_operand.hbm [shape: f32[8,40], index: 3, kind: input, shape index: {}]
  %s4 = inlined_call_operand.hbm [shape: f32[8,128], index: 4, kind: output, shape index: {}]
  %s5 = sld [smem:[#allocation0]]
  $region42: #{tpu_custom_call.1} parent=0
    _
  %s7 = ssub.s32 1, %s5
  %s8 = scalar_select 0, %s7, %s5
  $region1: #{tpu_custom_call.1} parent=0
    #allocation3 [shape = 'u8[8192]{0}', space=vmem, size = 0x2000, scoped, tag = 'input window, operand 0, single buffered']
    #allocation4 [shape = 's32[1]{0}', space=sflag, size = 0x4, scoped, tag = 'scoped memory for tpu_custom_call.1']
    #allocation5 [shape = 's32[1]{0}', space=sflag, size = 0x4, scoped, tag = 'scoped memory for tpu_custom_call.1']
    #allocation6 [shape = 'u8[262144]{0}', space=vmem, size = 0x40000, scoped, tag = 'input window, operand 1, single buffered']
    #allocation7 [shape = 's32[1]{0}', space=sflag, size = 0x4, scoped, tag = 'scoped memory for tpu_custom_call.1']
    #allocation8 [shape = 'u8[8192]{0}', space=vmem, size = 0x2000, scoped, tag = 'input window, operand 2, single buffered']
    #allocation9 [shape = 'u8[4096]{0}', space=vmem, size = 0x1000, scoped, tag = 'input window, operand 3, single buffered']
    #allocation10 [shape = 's32[1]{0}', space=sflag, size = 0x4, scoped, tag = 'scoped memory for tpu_custom_call.1']
    #allocation11 [shape = 'u8[4096]{0}', space=vmem, size = 0x1000, scoped, tag = 'output window, operand 0, single buffered']
    %9 = vsyncpa [#allocation4], 0
    %10 = vsyncpa [#allocation7], 0
    %11 = vsyncpa [#allocation10], 0
    %12 = vsyncpa [#allocation5], 0
    // Predicated region
    $region2: #{tpu_custom_call.1} parent=1 // pred_check
      _
    $region3: #{tpu_custom_call.1} parent=1 // pred_check_branch
      %14 = sbr.rel (0) target = $region5
    $region4: #{tpu_custom_call.1} parent=1 // pred_region
      %s16 = ssub.s32 256, 256
      %17 = vsyncadd [#allocation4], %s16
      %s19 = sshll.u32 [#allocation3], 4
      %s20 = int_to_ptr.vmem [resolvable:$true] %s19
      %22 = dma.hbm_to_vmem [thread:$0]  %s0, 256, %s20, [#allocation4]
    $region5: #{tpu_custom_call.1} parent=1 // pred_fallthru
      _
    // Predicated region
    $region6: #{tpu_custom_call.1} parent=1 // pred_check
      _
    $region7: #{tpu_custom_call.1} parent=1 // pred_check_branch
      %24 = sbr.rel (0) target = $region9
    $region8: #{tpu_custom_call.1} parent=1 // pred_region
      %s26 = ssub.s32 8192, 8192
      %27 = vsyncadd [#allocation7], %s26
      %s28 = sshll.u32 [#allocation6], 4
      %s29 = int_to_ptr.vmem [resolvable:$true] %s28
      %34 = dma.hbm_to_vmem [thread:$0]  %s1, 8192, %s29, [#allocation7], 128, 128, 8
    $region9: #{tpu_custom_call.1} parent=1 // pred_fallthru
      _
    // Predicated region
    $region10: #{tpu_custom_call.1} parent=1 // pred_check
      _
    $region11: #{tpu_custom_call.1} parent=1 // pred_check_branch
      %36 = sbr.rel (0) target = $region13
    $region12: #{tpu_custom_call.1} parent=1 // pred_region
      %s38 = ssub.s32 256, 256
      %39 = vsyncadd [#allocation7], %s38
      %s40 = sshll.u32 [#allocation8], 4
      %s41 = int_to_ptr.vmem [resolvable:$true] %s40
      %46 = dma.hbm_to_vmem [thread:$0]  %s2, 256, %s41, [#allocation7], 128, 128, 8
    $region13: #{tpu_custom_call.1} parent=1 // pred_fallthru
      _
    // Predicated region
    $region14: #{tpu_custom_call.1} parent=1 // pred_check
      _
    $region15: #{tpu_custom_call.1} parent=1 // pred_check_branch
      %48 = sbr.rel (0) target = $region17
    $region16: #{tpu_custom_call.1} parent=1 // pred_region
      %s50 = ssub.s32 128, 128
      %51 = vsyncadd [#allocation10], %s50
      %s53 = sshll.u32 [#allocation9], 4
      %s54 = int_to_ptr.vmem [resolvable:$true] %s53
      %56 = dma.hbm_to_vmem [thread:$0]  %s3, 128, %s54, [#allocation10]
    $region17: #{tpu_custom_call.1} parent=1 // pred_fallthru
      _
    // Predicated region
    $region18: #{tpu_custom_call.1} parent=1 // pred_check
      _
    $region19: #{tpu_custom_call.1} parent=1 // pred_check_branch
      %58 = sbr.rel (0) target = $region21
    $region20: #{tpu_custom_call.1} parent=1 // pred_region
      %59 = dma.done [#allocation4], 256
    $region21: #{tpu_custom_call.1} parent=1 // pred_fallthru
      _
    // Predicated region
    $region22: #{tpu_custom_call.1} parent=1 // pred_check
      _
    $region23: #{tpu_custom_call.1} parent=1 // pred_check_branch
      %61 = sbr.rel (0) target = $region25
    $region24: #{tpu_custom_call.1} parent=1 // pred_region
      %62 = dma.done [#allocation7], 8192
    $region25: #{tpu_custom_call.1} parent=1 // pred_fallthru
      _
    // Predicated region
    $region26: #{tpu_custom_call.1} parent=1 // pred_check
      _
    $region27: #{tpu_custom_call.1} parent=1 // pred_check_branch
      %64 = sbr.rel (0) target = $region29
    $region28: #{tpu_custom_call.1} parent=1 // pred_region
      %65 = dma.done [#allocation7], 256
    $region29: #{tpu_custom_call.1} parent=1 // pred_fallthru
      _
    // Predicated region
    $region30: #{tpu_custom_call.1} parent=1 // pred_check
      _
    $region31: #{tpu_custom_call.1} parent=1 // pred_check_branch
      %67 = sbr.rel (0) target = $region33
    $region32: #{tpu_custom_call.1} parent=1 // pred_region
      %68 = dma.done [#allocation10], 128
    $region33: #{tpu_custom_call.1} parent=1 // pred_fallthru
      _
    %v69 = vld [vmem:[#allocation3] sm:$0xff]
    %v70 = vld [vmem:[#allocation3 + $0x8] sm:$0xff]
    %v73 = vcombine.high %v69, %v69
    %v74 = vcombine.high %v70, %v70
    %77 = vrot.lane.b32.xlu0 %v69, 127
    %v78 = vpop.permute.xlu0 %77
    %79 = vrot.lane.b32.xlu0 %v73, 127
    %v80 = vpop.permute.xlu0 %79
    %81 = vrot.lane.b32.xlu0 %v70, 127
    %v82 = vpop.permute.xlu0 %81
    %83 = vrot.lane.b32.xlu0 %v74, 127
    %v84 = vpop.permute.xlu0 %83
    %v85 = vlaneseq
    %v86 = vand.u32 %v85, 127
    %vm87 = vcmp.lt.s32.totalorder %v86, 127
    %v88 = vsel %vm87, %v82, %v84
    %v89 = vsel %vm87, %v80, %v82
    %v90 = vsel %vm87, %v78, %v80
    %v91 = vsel %vm87, %v84, %v78
    %v96 = vcombine.low %v90, %v89
    %v97 = vcombine.low %v88, %v91
    %v100 = vmax.f32 %v69, %v96
    %v101 = vmax.f32 %v70, %v97
    %v104 = vcombine.high %v100, %v100
    %v105 = vcombine.high %v101, %v101
    %108 = vrot.lane.b32.xlu0 %v100, 112
    %v109 = vpop.permute.xlu0 %108
    %110 = vrot.lane.b32.xlu0 %v104, 112
    %v111 = vpop.permute.xlu0 %110
    %112 = vrot.lane.b32.xlu0 %v101, 112
    %v113 = vpop.permute.xlu0 %112
    %114 = vrot.lane.b32.xlu0 %v105, 112
    %v115 = vpop.permute.xlu0 %114
    %vm116 = vcmp.lt.s32.totalorder %v86, 112
    %v117 = vsel %vm116, %v113, %v115
    %v118 = vsel %vm116, %v111, %v113
    %v119 = vsel %vm116, %v109, %v111
    %v120 = vsel %vm116, %v115, %v109
    %v125 = vcombine.low %v119, %v118
    %v126 = vcombine.low %v117, %v120
    %v129 = vmax.f32 %v100, %v125
    %v130 = vmax.f32 %v101, %v126
    %v131 = vld [vmem:[#allocation6] sm:$0xff]
    %v132 = vld [vmem:[#allocation6 + $0x8] sm:$0xff]
    %v133 = vld [vmem:[#allocation6 + $0x10] sm:$0xff]
    %v134 = vld [vmem:[#allocation6 + $0x18] sm:$0xff]
    %v135 = vld [vmem:[#allocation6 + $0x20] sm:$0xff]
    %v136 = vld [vmem:[#allocation6 + $0x28] sm:$0xff]
    %v137 = vld [vmem:[#allocation6 + $0x30] sm:$0xff]
    %v138 = vld [vmem:[#allocation6 + $0x38] sm:$0xff]
    %v139 = vld [vmem:[#allocation6 + $0x40] sm:$0xff]
    %v140 = vld [vmem:[#allocation6 + $0x48] sm:$0xff]
    %v141 = vld [vmem:[#allocation6 + $0x50] sm:$0xff]
    %v142 = vld [vmem:[#allocation6 + $0x58] sm:$0xff]
    %v143 = vld [vmem:[#allocation6 + $0x60] sm:$0xff]
    %v144 = vld [vmem:[#allocation6 + $0x68] sm:$0xff]
    %v145 = vld [vmem:[#allocation6 + $0x70] sm:$0xff]
    %v146 = vld [vmem:[#allocation6 + $0x78] sm:$0xff]
    %v147 = vld [vmem:[#allocation6 + $0x80] sm:$0xff]
    %v148 = vld [vmem:[#allocation6 + $0x88] sm:$0xff]
    %v149 = vld [vmem:[#allocation6 + $0x90] sm:$0xff]
    %v150 = vld [vmem:[#allocation6 + $0x98] sm:$0xff]
    %v151 = vld [vmem:[#allocation6 + $0xa0] sm:$0xff]
    %v152 = vld [vmem:[#allocation6 + $0xa8] sm:$0xff]
    %v153 = vld [vmem:[#allocation6 + $0xb0] sm:$0xff]
    %v154 = vld [vmem:[#allocation6 + $0xb8] sm:$0xff]
    %v155 = vld [vmem:[#allocation6 + $0xc0] sm:$0xff]
    %v156 = vld [vmem:[#allocation6 + $0xc8] sm:$0xff]
    %v157 = vld [vmem:[#allocation6 + $0xd0] sm:$0xff]
    %v158 = vld [vmem:[#allocation6 + $0xd8] sm:$0xff]
    %v159 = vld [vmem:[#allocation6 + $0xe0] sm:$0xff]
    %v160 = vld [vmem:[#allocation6 + $0xe8] sm:$0xff]
    %v161 = vld [vmem:[#allocation6 + $0xf0] sm:$0xff]
    %v162 = vld [vmem:[#allocation6 + $0xf8] sm:$0xff]
    %v163 = vld [vmem:[#allocation6 + $0x100] sm:$0xff]
    %v164 = vld [vmem:[#allocation6 + $0x108] sm:$0xff]
    %v165 = vld [vmem:[#allocation6 + $0x110] sm:$0xff]
    %v166 = vld [vmem:[#allocation6 + $0x118] sm:$0xff]
    %v167 = vld [vmem:[#allocation6 + $0x120] sm:$0xff]
    %v168 = vld [vmem:[#allocation6 + $0x128] sm:$0xff]
    %v169 = vld [vmem:[#allocation6 + $0x130] sm:$0xff]
    %v170 = vld [vmem:[#allocation6 + $0x138] sm:$0xff]
    %v171 = vld [vmem:[#allocation6 + $0x140] sm:$0xff]
    %v172 = vld [vmem:[#allocation6 + $0x148] sm:$0xff]
    %v173 = vld [vmem:[#allocation6 + $0x150] sm:$0xff]
    %v174 = vld [vmem:[#allocation6 + $0x158] sm:$0xff]
    %v175 = vld [vmem:[#allocation6 + $0x160] sm:$0xff]
    %v176 = vld [vmem:[#allocation6 + $0x168] sm:$0xff]
    %v177 = vld [vmem:[#allocation6 + $0x170] sm:$0xff]
    %v178 = vld [vmem:[#allocation6 + $0x178] sm:$0xff]
    %v179 = vld [vmem:[#allocation6 + $0x180] sm:$0xff]
    %v180 = vld [vmem:[#allocation6 + $0x188] sm:$0xff]
    %v181 = vld [vmem:[#allocation6 + $0x190] sm:$0xff]
    %v182 = vld [vmem:[#allocation6 + $0x198] sm:$0xff]
    %v183 = vld [vmem:[#allocation6 + $0x1a0] sm:$0xff]
    %v184 = vld [vmem:[#allocation6 + $0x1a8] sm:$0xff]
    %v185 = vld [vmem:[#allocation6 + $0x1b0] sm:$0xff]
    %v186 = vld [vmem:[#allocation6 + $0x1b8] sm:$0xff]
    %v187 = vld [vmem:[#allocation6 + $0x1c0] sm:$0xff]
    %v188 = vld [vmem:[#allocation6 + $0x1c8] sm:$0xff]
    %v189 = vld [vmem:[#allocation6 + $0x1d0] sm:$0xff]
    %v190 = vld [vmem:[#allocation6 + $0x1d8] sm:$0xff]
    %v191 = vld [vmem:[#allocation6 + $0x1e0] sm:$0xff]
    %v192 = vld [vmem:[#allocation6 + $0x1e8] sm:$0xff]
    %v193 = vld [vmem:[#allocation6 + $0x1f0] sm:$0xff]
    %v194 = vld [vmem:[#allocation6 + $0x1f8] sm:$0xff]
    %v197 = vcombine.high %v129, %v129
    %v198 = vcombine.high %v130, %v130
    %201 = vmatprep.subr.mxu0 0.0
    %202 = vmatpush1.msra.mxu0 %v146
    %203 = vmatprep.subr.mxu0 0.0
    %204 = vmatpush1.msra.mxu0 %v145
    %205 = vmatprep.subr.mxu0 0.0
    %206 = vmatpush1.msra.mxu0 %v144
    %207 = vmatprep.subr.mxu0 0.0
    %208 = vmatpush1.msra.mxu0 %v143
    %209 = vmatprep.subr.mxu0 0.0
    %210 = vmatpush1.msra.mxu0 %v142
    %211 = vmatprep.subr.mxu0 0.0
    %212 = vmatpush1.msra.mxu0 %v141
    %213 = vmatprep.subr.mxu0 0.0
    %214 = vmatpush1.msra.mxu0 %v140
    %215 = vmatprep.subr.mxu0 0.0
    %216 = vmatpush1.msra.mxu0 %v139
    %217 = vmatprep.subr.mxu0 0.0
    %218 = vmatpush1.msra.mxu0 %v138
    %219 = vmatprep.subr.mxu0 0.0
    %220 = vmatpush1.msra.mxu0 %v137
    %221 = vmatprep.subr.mxu0 0.0
    %222 = vmatpush1.msra.mxu0 %v136
    %223 = vmatprep.subr.mxu0 0.0
    %224 = vmatpush1.msra.mxu0 %v135
    %225 = vmatprep.subr.mxu0 0.0
    %226 = vmatpush1.msra.mxu0 %v134
    %227 = vmatprep.subr.mxu0 0.0
    %228 = vmatpush1.msra.mxu0 %v133
    %229 = vmatprep.subr.mxu0 0.0
    %230 = vmatpush1.msra.mxu0 %v132
    %231 = vmatprep.subr.mxu0 0.0
    %232 = vmatpush1.msra.mxu0 %v131
    %233 = vmatprep.subr.mxu0 0.0
    %234 = vmatpush2.msra.mxu0 %v162
    %235 = vmatprep.subr.mxu0 0.0
    %236 = vmatpush2.msra.mxu0 %v161
    %237 = vmatprep.subr.mxu0 0.0
    %238 = vmatpush2.msra.mxu0 %v160
    %239 = vmatprep.subr.mxu0 0.0
    %240 = vmatpush2.msra.mxu0 %v159
    %241 = vmatprep.subr.mxu0 0.0
    %242 = vmatpush2.msra.mxu0 %v158
    %243 = vmatprep.subr.mxu0 0.0
    %244 = vmatpush2.msra.mxu0 %v157
    %245 = vmatprep.subr.mxu0 0.0
    %246 = vmatpush2.msra.mxu0 %v156
    %247 = vmatprep.subr.mxu0 0.0
    %248 = vmatpush2.msra.mxu0 %v155
    %249 = vmatprep.subr.mxu0 0.0
    %250 = vmatpush2.msra.mxu0 %v154
    %251 = vmatprep.subr.mxu0 0.0
    %252 = vmatpush2.msra.mxu0 %v153
    %253 = vmatprep.subr.mxu0 0.0
    %254 = vmatpush2.msra.mxu0 %v152
    %255 = vmatprep.subr.mxu0 0.0
    %256 = vmatpush2.msra.mxu0 %v151
    %257 = vmatprep.subr.mxu0 0.0
    %258 = vmatpush2.msra.mxu0 %v150
    %259 = vmatprep.subr.mxu0 0.0
    %260 = vmatpush2.msra.mxu0 %v149
    %261 = vmatprep.subr.mxu0 0.0
    %262 = vmatpush2.msra.mxu0 %v148
    %263 = vmatprep.subr.mxu0 0.0
    %264 = vmatpush2.msra.mxu0 %v147
    %265 = vmatprep.mubr.f32.mxu0 %v197
    %266 = vmatmul.mubr.f32.gmra.mxu0 %v129
    %v267 = vpop.f32.mrf.mxu0
    %v268 = vadd.f32 0.0, %v267
    %v269 = vpop.f32.mrf.mxu0
    %270 = vdwg.mxu0
    %271 = vmatprep.subr.mxu0 0.0
    %272 = vmatpush1.msra.mxu0 %v178
    %273 = vmatprep.subr.mxu0 0.0
    %274 = vmatpush1.msra.mxu0 %v177
    %275 = vmatprep.subr.mxu0 0.0
    %276 = vmatpush1.msra.mxu0 %v176
    %277 = vmatprep.subr.mxu0 0.0
    %278 = vmatpush1.msra.mxu0 %v175
    %279 = vmatprep.subr.mxu0 0.0
    %280 = vmatpush1.msra.mxu0 %v174
    %281 = vmatprep.subr.mxu0 0.0
    %282 = vmatpush1.msra.mxu0 %v173
    %283 = vmatprep.subr.mxu0 0.0
    %284 = vmatpush1.msra.mxu0 %v172
    %285 = vmatprep.subr.mxu0 0.0
    %286 = vmatpush1.msra.mxu0 %v171
    %287 = vmatprep.subr.mxu0 0.0
    %288 = vmatpush1.msra.mxu0 %v170
    %289 = vmatprep.subr.mxu0 0.0
    %290 = vmatpush1.msra.mxu0 %v169
    %291 = vmatprep.subr.mxu0 0.0
    %292 = vmatpush1.msra.mxu0 %v168
    %293 = vmatprep.subr.mxu0 0.0
    %294 = vmatpush1.msra.mxu0 %v167
    %295 = vmatprep.subr.mxu0 0.0
    %296 = vmatpush1.msra.mxu0 %v166
    %297 = vmatprep.subr.mxu0 0.0
    %298 = vmatpush1.msra.mxu0 %v165
    %299 = vmatprep.subr.mxu0 0.0
    %300 = vmatpush1.msra.mxu0 %v164
    %301 = vmatprep.subr.mxu0 0.0
    %302 = vmatpush1.msra.mxu0 %v163
    %303 = vmatprep.subr.mxu0 0.0
    %304 = vmatpush2.msra.mxu0 %v194
    %305 = vmatprep.subr.mxu0 0.0
    %306 = vmatpush2.msra.mxu0 %v193
    %307 = vmatprep.subr.mxu0 0.0
    %308 = vmatpush2.msra.mxu0 %v192
    %309 = vmatprep.subr.mxu0 0.0
    %310 = vmatpush2.msra.mxu0 %v191
    %311 = vmatprep.subr.mxu0 0.0
    %312 = vmatpush2.msra.mxu0 %v190
    %313 = vmatprep.subr.mxu0 0.0
    %314 = vmatpush2.msra.mxu0 %v189
    %315 = vmatprep.subr.mxu0 0.0
    %316 = vmatpush2.msra.mxu0 %v188
    %317 = vmatprep.subr.mxu0 0.0
    %318 = vmatpush2.msra.mxu0 %v187
    %319 = vmatprep.subr.mxu0 0.0
    %320 = vmatpush2.msra.mxu0 %v186
    %321 = vmatprep.subr.mxu0 0.0
    %322 = vmatpush2.msra.mxu0 %v185
    %323 = vmatprep.subr.mxu0 0.0
    %324 = vmatpush2.msra.mxu0 %v184
    %325 = vmatprep.subr.mxu0 0.0
    %326 = vmatpush2.msra.mxu0 %v183
    %327 = vmatprep.subr.mxu0 0.0
    %328 = vmatpush2.msra.mxu0 %v182
    %329 = vmatprep.subr.mxu0 0.0
    %330 = vmatpush2.msra.mxu0 %v181
    %331 = vmatprep.subr.mxu0 0.0
    %332 = vmatpush2.msra.mxu0 %v180
    %333 = vmatprep.subr.mxu0 0.0
    %334 = vmatpush2.msra.mxu0 %v179
    %335 = vmatprep.mubr.f32.mxu0 %v198
    %336 = vmatmul.mubr.f32.gmra.mxu0 %v130
    %v337 = vpop.f32.mrf.mxu0
    %v338 = vadd.f32 %v268, %v337
    %v339 = vpop.f32.mrf.mxu0
    %340 = vdwg.mxu0
    %341 = vrot.lane.b32.xlu0 %v338, 9
    %v342 = vpop.permute.xlu0 %341
    %v343 = vld [vmem:[#allocation8] sm:$0x1]
    %v344 = vlaneseq
    %v345 = vshrl.u32 %v344, 7
    %v346 = vsub.s32 0, %v345
    %v347 = vrot.slane %v343, %v346
    %v348 = vmul.f32 %v342, %v347
    %349 = vst [vmem:[#allocation2] sm:$0xf] %v348
    %350 = vrot.lane.b32.xlu0 %v338, 8
    %v351 = vpop.permute.xlu0 %350
    %v352 = vld [vmem:[#allocation8 + $0x1] sm:$0x1]
    %v353 = vlaneseq
    %v354 = vshrl.u32 %v353, 7
    %v355 = vsub.s32 0, %v354
    %v356 = vrot.slane %v352, %v355
    %v357 = vmul.f32 %v351, %v356
    %358 = vst [vmem:[#allocation2 + $0x4] sm:$0xf] %v357
    %359 = vrot.lane.b32.xlu0 %v338, 7
    %v360 = vpop.permute.xlu0 %359
    %v361 = vld [vmem:[#allocation8 + $0x2] sm:$0x1]
    %v362 = vlaneseq
    %v363 = vshrl.u32 %v362, 7
    %v364 = vsub.s32 0, %v363
    %v365 = vrot.slane %v361, %v364
    %v366 = vmul.f32 %v360, %v365
    %367 = vst [vmem:[#allocation2 + $0x8] sm:$0xf] %v366
    %368 = vrot.lane.b32.xlu0 %v338, 1
    %v369 = vpop.permute.xlu0 %368
    %v370 = vld [vmem:[#allocation8 + $0x3] sm:$0x1]
    %v371 = vlaneseq
    %v372 = vshrl.u32 %v371, 7
    %v373 = vsub.s32 0, %v372
    %v374 = vrot.slane %v370, %v373
    %v375 = vmul.f32 %v369, %v374
    %376 = vst [vmem:[#allocation2 + $0xc] sm:$0xf] %v375
    %377 = vst [vmem:[#allocation2 + $0x10] sm:$0xf] %v338
    %378 = vrot.lane.b32.xlu0 %v338, 127
    %v379 = vpop.permute.xlu0 %378
    %v380 = vld [vmem:[#allocation8 + $0x5] sm:$0x1]
    %v381 = vlaneseq
    %v382 = vshrl.u32 %v381, 7
    %v383 = vsub.s32 0, %v382
    %v384 = vrot.slane %v380, %v383
    %v385 = vmul.f32 %v379, %v384
    %386 = vst [vmem:[#allocation2 + $0x14] sm:$0xf] %v385
    %387 = vrot.lane.b32.xlu0 %v338, 121
    %v388 = vpop.permute.xlu0 %387
    %v389 = vld [vmem:[#allocation8 + $0x6] sm:$0x1]
    %v390 = vlaneseq
    %v391 = vshrl.u32 %v390, 7
    %v392 = vsub.s32 0, %v391
    %v393 = vrot.slane %v389, %v392
    %v394 = vmul.f32 %v388, %v393
    %395 = vst [vmem:[#allocation2 + $0x18] sm:$0xf] %v394
    %396 = vrot.lane.b32.xlu0 %v338, 120
    %v397 = vpop.permute.xlu0 %396
    %v398 = vld [vmem:[#allocation8 + $0x7] sm:$0x1]
    %v399 = vlaneseq
    %v400 = vshrl.u32 %v399, 7
    %v401 = vsub.s32 0, %v400
    %v402 = vrot.slane %v398, %v401
    %v403 = vmul.f32 %v397, %v402
    %404 = vst [vmem:[#allocation2 + $0x1c] sm:$0xf] %v403
    %405 = vrot.lane.b32.xlu0 %v338, 119
    %v406 = vpop.permute.xlu0 %405
    %v407 = vld [vmem:[#allocation8 + $0x8] sm:$0x1]
    %v408 = vlaneseq
    %v409 = vshrl.u32 %v408, 7
    %v410 = vsub.s32 0, %v409
    %v411 = vrot.slane %v407, %v410
    %v412 = vmul.f32 %v406, %v411
    %413 = vst [vmem:[#allocation2 + $0x20] sm:$0xf] %v412
    %414 = vst [vmem:[#allocation2 + $0x24] sm:$0x1] 1.0
    %415 = vst [vmem:[#allocation2 + $0x25] sm:$0x7] 0.0
    %v416 = vld [vmem:[#allocation9] sm:$0xff]
    %v417 = vld [vmem:[#allocation2] sm:$0xff]
    %v418 = vld [vmem:[#allocation2 + $0x8] sm:$0xff]
    %v419 = vld [vmem:[#allocation2 + $0x10] sm:$0xff]
    %v420 = vld [vmem:[#allocation2 + $0x18] sm:$0xff]
    %v421 = vld [vmem:[#allocation2 + $0x20] sm:$0xff]
    %vm422 = vcmask 326656
    %v424 = vsel %vm422, %v416, 0
    %426 = vmatprep.subr.mxu0 0.0
    %427 = vmatpush1.msra.mxu0 0.0
    %428 = vmatprep.subr.mxu0 0.0
    %429 = vmatpush1.msra.mxu0 0.0
    %430 = vmatprep.subr.mxu0 0.0
    %431 = vmatpush1.msra.mxu0 0.0
    %432 = vmatprep.subr.mxu0 0.0
    %433 = vmatpush1.msra.mxu0 0.0
    %434 = vmatprep.subr.mxu0 0.0
    %435 = vmatpush1.msra.mxu0 0.0
    %436 = vmatprep.subr.mxu0 0.0
    %437 = vmatpush1.msra.mxu0 0.0
    %438 = vmatprep.subr.mxu0 0.0
    %439 = vmatpush1.msra.mxu0 0.0
    %440 = vmatprep.subr.mxu0 0.0
    %441 = vmatpush1.msra.mxu0 0.0
    %442 = vmatprep.subr.mxu0 0.0
    %443 = vmatpush1.msra.mxu0 0.0
    %444 = vmatprep.subr.mxu0 0.0
    %445 = vmatpush1.msra.mxu0 0.0
    %446 = vmatprep.subr.mxu0 0.0
    %447 = vmatpush1.msra.mxu0 0.0
    %448 = vmatprep.subr.mxu0 0.0
    %449 = vmatpush1.msra.mxu0 %v421
    %450 = vmatprep.subr.mxu0 0.0
    %451 = vmatpush1.msra.mxu0 %v420
    %452 = vmatprep.subr.mxu0 0.0
    %453 = vmatpush1.msra.mxu0 %v419
    %454 = vmatprep.subr.mxu0 0.0
    %455 = vmatpush1.msra.mxu0 %v418
    %456 = vmatprep.subr.mxu0 0.0
    %457 = vmatpush1.msra.mxu0 %v417
    %458 = vmatprep.subr.mxu0 0.0
    %459 = vmatpush2.msra.mxu0 0.0
    %460 = vmatprep.subr.mxu0 0.0
    %461 = vmatpush2.msra.mxu0 0.0
    %462 = vmatprep.subr.mxu0 0.0
    %463 = vmatpush2.msra.mxu0 0.0
    %464 = vmatprep.subr.mxu0 0.0
    %465 = vmatpush2.msra.mxu0 0.0
    %466 = vmatprep.subr.mxu0 0.0
    %467 = vmatpush2.msra.mxu0 0.0
    %468 = vmatprep.subr.mxu0 0.0
    %469 = vmatpush2.msra.mxu0 0.0
    %470 = vmatprep.subr.mxu0 0.0
    %471 = vmatpush2.msra.mxu0 0.0
    %472 = vmatprep.subr.mxu0 0.0
    %473 = vmatpush2.msra.mxu0 0.0
    %474 = vmatprep.subr.mxu0 0.0
    %475 = vmatpush2.msra.mxu0 0.0
    %476 = vmatprep.subr.mxu0 0.0
    %477 = vmatpush2.msra.mxu0 0.0
    %478 = vmatprep.subr.mxu0 0.0
    %479 = vmatpush2.msra.mxu0 0.0
    %480 = vmatprep.subr.mxu0 0.0
    %481 = vmatpush2.msra.mxu0 0.0
    %482 = vmatprep.subr.mxu0 0.0
    %483 = vmatpush2.msra.mxu0 0.0
    %484 = vmatprep.subr.mxu0 0.0
    %485 = vmatpush2.msra.mxu0 0.0
    %486 = vmatprep.subr.mxu0 0.0
    %487 = vmatpush2.msra.mxu0 0.0
    %488 = vmatprep.subr.mxu0 0.0
    %489 = vmatpush2.msra.mxu0 0.0
    %490 = vmatprep.mubr.f32.mxu0 0.0
    %491 = vmatmul.mubr.f32.gmra.mxu0 %v424
    %v492 = vpop.f32.mrf.mxu0
    %v493 = vadd.f32 0.0, %v492
    %v494 = vpop.f32.mrf.mxu0
    %495 = vdwg.mxu0
    %v496 = vmax.f32 %v493, 0.0
    %497 = vst [vmem:[#allocation11] sm:$0xff] %v496
    // Predicated region
    $region34: #{tpu_custom_call.1} parent=1 // pred_check
      _
    $region35: #{tpu_custom_call.1} parent=1 // pred_check_branch
      %499 = sbr.rel (0) target = $region37
    $region36: #{tpu_custom_call.1} parent=1 // pred_region
      %s501 = ssub.s32 128, 128
      %502 = vsyncadd [#allocation5], %s501
      %s504 = sshll.u32 [#allocation11], 4
      %s505 = int_to_ptr.vmem [resolvable:$true] %s504
      %507 = dma.vmem_to_hbm [thread:$0]  %s505, 128, %s4, [#allocation5]
    $region37: #{tpu_custom_call.1} parent=1 // pred_fallthru
      _
    // Predicated region
    $region38: #{tpu_custom_call.1} parent=1 // pred_check
      _
    $region39: #{tpu_custom_call.1} parent=1 // pred_check_branch
      %509 = sbr.rel (0) target = $region41
    $region40: #{tpu_custom_call.1} parent=1 // pred_region
      %510 = dma.done [#allocation5], 128
    $region41: #{tpu_custom_call.1} parent=1 // pred_fallthru
      _
    %511 = vsyncpa [#allocation4], 1
    %512 = vsyncpa [#allocation7], 1
    %513 = vsyncpa [#allocation10], 1
    %514 = vsyncpa [#allocation5], 1

</llo_original>
